<compile_context>
chip_gen: v7x
topology: tpu7x:2x2x1
jax: 0.10.0
libtpu: 0.0.40
codegen_flags: <defaults>
</compile_context>

<pallas_src>
import functools

import jax
import jax.numpy as jnp
import numpy as np
from jax.experimental import pallas as pl
from jax.experimental.pallas import tpu as pltpu

_LANES = 128
_SUBLANES = 8


def _cdiv(a, b):
    return -(-a // b)


def _round_up(x, m):
    return _cdiv(x, m) * m


def _sq_err_kernel(p_ref, t_ref, acc_ref):
    """acc[p] += (pred - target)**2 over the current (N, Sc, 128) chunk."""
    @pl.when(pl.program_id(1) == 0)
    def _():
        acc_ref[...] = jnp.zeros_like(acc_ref)

    d = p_ref[...] - t_ref[...]          # (N, Sc, 128) f32, pure VPU work
    acc_ref[...] += d * d                # vector-shaped resident accumulator


def _choose_tiling(n, d):
    """Pick (Sc, P, K, S_pad): dense (N, Sc, 128) blocks, <= ~2 MiB per buffer."""
    s = _cdiv(d, _LANES)                          # rows of 128 lanes per sample
    s_rnd = _round_up(s, _SUBLANES)
    max_block_bytes = 2 * 1024 * 1024
    max_sc = max(_SUBLANES,
                 (max_block_bytes // (4 * _LANES * max(n, 1)))
                 // _SUBLANES * _SUBLANES)
    sc = min(s_rnd, max_sc)
    n_chunks = _cdiv(s_rnd, sc)
    p = 2 if n_chunks >= 2 else 1                 # megacore split on v7x
    k = _cdiv(n_chunks, p)
    s_pad = p * k * sc
    return sc, p, k, s_pad


def _per_sample_sse(pred2d, tgt2d):
    """pred2d, tgt2d: (N, D) float32 -> per-sample sum of squared error (N,)."""
    n, d = pred2d.shape
    sc, p, k, s_pad = _choose_tiling(n, d)

    pad = s_pad * _LANES - d
    if pad:
        # Zero padding contributes zero squared error.
        pred2d = jnp.pad(pred2d, ((0, 0), (0, pad)))
        tgt2d = jnp.pad(tgt2d, ((0, 0), (0, pad)))
    pred3d = pred2d.reshape(n, s_pad, _LANES)
    tgt3d = tgt2d.reshape(n, s_pad, _LANES)

    in_block = pl.BlockSpec((n, sc, _LANES), lambda pi, ki: (0, pi * k + ki, 0))

    grid_spec = pltpu.PrefetchScalarGridSpec(
        num_scalar_prefetch=0,
        grid=(p, k),                               # reduction axis (k) last
        in_specs=[in_block, in_block],
        out_specs=pl.BlockSpec((None, n, sc, _LANES),
                               lambda pi, ki: (pi, 0, 0, 0)),
    )

    partial = pl.pallas_call(
        _sq_err_kernel,
        out_shape=jax.ShapeDtypeStruct((p, n, sc, _LANES), jnp.float32),
        grid_spec=grid_spec,
        compiler_params=pltpu.CompilerParams(
            dimension_semantics=("parallel", "arbitrary")),
    )(pred3d, tgt3d)

    return jnp.sum(partial, axis=(0, 2, 3))        # (N,) per-sample SSE


_Y_COEF = np.array([65.481, 128.553, 24.966], dtype=np.float32)


@functools.partial(jax.jit, static_argnames=("loss_weight", "toY"))
def psnr_loss(pred, target, loss_weight=1.0, toY=False):
    """JAX/Pallas equivalent of basicsr PSNRLoss.forward (reduction='mean')."""
    assert pred.ndim == 4 and target.ndim == 4
    pred = pred.astype(jnp.float32)
    target = target.astype(jnp.float32)

    if toY:
        # Trivial elementwise preprocessing, done in plain JAX outside the kernel.
        coef = jnp.asarray(_Y_COEF).reshape(1, 3, 1, 1)
        pred = jnp.sum(pred * coef, axis=1, keepdims=True) + 16.0
        target = jnp.sum(target * coef, axis=1, keepdims=True) + 16.0
        pred = pred / 255.0
        target = target / 255.0

    n, c, h, w = pred.shape
    d = c * h * w
    sse = _per_sample_sse(pred.reshape(n, d), target.reshape(n, d))
    mse = sse / jnp.float32(d)
    scale = 10.0 / np.log(10.0)
    return loss_weight * scale * jnp.mean(jnp.log(mse + 1e-8))


if __name__ == "__main__":
    key = jax.random.PRNGKey(0)
    k1, k2 = jax.random.split(key)
    N, C, H, W = 2, 4, 16, 16
    pred = jax.random.normal(k1, (N, C, H, W), dtype=jnp.float32)
    target = jax.random.normal(k2, (N, C, H, W), dtype=jnp.float32)

    loss = psnr_loss(pred, target, loss_weight=1.0)
    jax.block_until_ready(loss)

    # Pure-JAX reference (same math as the PyTorch module, toY=False).
    scale = 10.0 / np.log(10.0)
    ref = scale * jnp.mean(
        jnp.log(jnp.mean((pred - target) ** 2, axis=(1, 2, 3)) + 1e-8))
    assert jnp.allclose(loss, ref, rtol=1e-4, atol=1e-5), (loss, ref)

    print("KERNEL_OK")
</pallas_src>

<mosaic_0001>
module attributes {stable_mosaic.version = 11 : i64} {
  func.func @_sq_err_kernel(%arg0: i32, %arg1: i32, %arg2: memref<2x8x128xf32, #tpu.memory_space<vmem>>, %arg3: memref<2x8x128xf32, #tpu.memory_space<vmem>>, %arg4: memref<1x2x8x128xf32, #tpu.memory_space<vmem>>) attributes {dimension_semantics = [#tpu.dimension_semantics<parallel>, #tpu.dimension_semantics<arbitrary>], iteration_bounds = array<i64: 1, 1>, scalar_prefetch = 0 : i64, scratch_operands = 0 : i64, tpu.core_type = #tpu.core_type<tc>, window_params = [{transform_indices = @transform_0, window_bounds = array<i64: 2, 8, 128>}, {transform_indices = @transform_1, window_bounds = array<i64: 2, 8, 128>}, {transform_indices = @transform_2, window_bounds = array<i64: 1, 2, 8, 128>}]} {
    %c0_i32 = arith.constant 0 : i32
    %0 = arith.cmpi eq, %arg1, %c0_i32 : i32
    %1 = arith.extui %0 : i1 to i32
    %c0_i32_0 = arith.constant 0 : i32
    %2 = arith.cmpi ne, %1, %c0_i32_0 : i32
    scf.if %2 {
      %cst = arith.constant 0.000000e+00 : f32
      %13 = vector.broadcast %cst : f32 to vector<2x8x128xf32>
      %c0_14 = arith.constant 0 : index
      %c0_15 = arith.constant 0 : index
      %c0_16 = arith.constant 0 : index
      %c0_17 = arith.constant 0 : index
      %14 = vector.load %arg4[%c0_14, %c0_15, %c0_16, %c0_17] : memref<1x2x8x128xf32, #tpu.memory_space<vmem>>, vector<1x2x8x128xf32>
      %15 = vector.shape_cast %14 : vector<1x2x8x128xf32> to vector<2x8x128xf32>
      %16 = vector.shape_cast %13 : vector<2x8x128xf32> to vector<1x2x8x128xf32>
      tpu.vector_store %arg4[%c0_14, %c0_15, %c0_16, %c0_17], %16 {strides = array<i32>} : memref<1x2x8x128xf32, #tpu.memory_space<vmem>>, vector<1x2x8x128xf32>,
    } else {
    }
    %c0 = arith.constant 0 : index
    %c0_1 = arith.constant 0 : index
    %c0_2 = arith.constant 0 : index
    %3 = vector.load %arg2[%c0, %c0_1, %c0_2] : memref<2x8x128xf32, #tpu.memory_space<vmem>>, vector<2x8x128xf32>
    %c0_3 = arith.constant 0 : index
    %c0_4 = arith.constant 0 : index
    %c0_5 = arith.constant 0 : index
    %4 = vector.load %arg3[%c0_3, %c0_4, %c0_5] : memref<2x8x128xf32, #tpu.memory_space<vmem>>, vector<2x8x128xf32>
    %5 = arith.subf %3, %4 : vector<2x8x128xf32>
    %c0_6 = arith.constant 0 : index
    %c0_7 = arith.constant 0 : index
    %c0_8 = arith.constant 0 : index
    %c0_9 = arith.constant 0 : index
    %6 = vector.load %arg4[%c0_6, %c0_7, %c0_8, %c0_9] : memref<1x2x8x128xf32, #tpu.memory_space<vmem>>, vector<1x2x8x128xf32>
    %7 = vector.shape_cast %6 : vector<1x2x8x128xf32> to vector<2x8x128xf32>
    %8 = arith.mulf %5, %5 : vector<2x8x128xf32>
    %9 = arith.addf %7, %8 : vector<2x8x128xf32>
    %c0_10 = arith.constant 0 : index
    %c0_11 = arith.constant 0 : index
    %c0_12 = arith.constant 0 : index
    %c0_13 = arith.constant 0 : index
    %10 = vector.load %arg4[%c0_10, %c0_11, %c0_12, %c0_13] : memref<1x2x8x128xf32, #tpu.memory_space<vmem>>, vector<1x2x8x128xf32>
    %11 = vector.shape_cast %10 : vector<1x2x8x128xf32> to vector<2x8x128xf32>
    %12 = vector.shape_cast %9 : vector<2x8x128xf32> to vector<1x2x8x128xf32>
    tpu.vector_store %arg4[%c0_10, %c0_11, %c0_12, %c0_13], %12 {strides = array<i32>} : memref<1x2x8x128xf32, #tpu.memory_space<vmem>>, vector<1x2x8x128xf32>,
    return
  }
  func.func @transform_0(%arg0: i32, %arg1: i32) -> (i32, i32, i32) {
    %c1_i32 = arith.constant 1 : i32
    %0 = arith.muli %arg0, %c1_i32 : i32
    %1 = arith.addi %0, %arg1 : i32
    %c0_i32 = arith.constant 0 : i32
    %c0_i32_0 = arith.constant 0 : i32
    %c0_i32_1 = arith.constant 0 : i32
    return %c0_i32, %1, %c0_i32_0 : i32, i32, i32
  }
  func.func @transform_1(%arg0: i32, %arg1: i32) -> (i32, i32, i32) {
    %c1_i32 = arith.constant 1 : i32
    %0 = arith.muli %arg0, %c1_i32 : i32
    %1 = arith.addi %0, %arg1 : i32
    %c0_i32 = arith.constant 0 : i32
    %c0_i32_0 = arith.constant 0 : i32
    %c0_i32_1 = arith.constant 0 : i32
    return %c0_i32, %1, %c0_i32_0 : i32, i32, i32
  }
  func.func @transform_2(%arg0: i32, %arg1: i32) -> (i32, i32, i32, i32) {
    %c0_i32 = arith.constant 0 : i32
    %c0_i32_0 = arith.constant 0 : i32
    %c0_i32_1 = arith.constant 0 : i32
    %c0_i32_2 = arith.constant 0 : i32
    return %arg0, %c0_i32, %c0_i32_0, %c0_i32_1 : i32, i32, i32, i32
  }
}

</mosaic_0001>

<llo_original>
// kernel: psnr_loss.1
$region0: #{psnr_loss.1}
  #allocation0 [shape = 'u32[]', space=smem, size = 0x4, offset = 0x4, fixed_abs, tag = 'smem constant byte address 0x4 - core index']
  #allocation1 [shape = 'u32[144,128]{1,0:T(1,128)}', space=vmem, size = 0x12000, scoped, tag = 'internal scratch']
  %s0 = inlined_call_operand.vmem [shape: f32[2,8,128], index: 0, kind: input, shape index: {}]
  %s1 = inlined_call_operand.vmem [shape: f32[2,8,128], index: 1, kind: input, shape index: {}]
  %s2 = inlined_call_operand.vmem [shape: f32[1,2,8,128], index: 2, kind: output, shape index: {}]
  %s3 = sld [smem:[#allocation0]]
  $region22: #{psnr_loss.1} parent=0
    _
  %s5 = ssub.s32 1, %s3
  %s6 = scalar_select 0, %s5, %s3
  // Predicated region
  $region2: #{psnr_loss.1} parent=0 // pred_check
    _
  $region3: #{psnr_loss.1} parent=0 // pred_check_branch
    %8 = sbr.rel (0) target = $region5
  $region4: #{psnr_loss.1} parent=0 // pred_region
    %s9 = sadd.s32 0, 0
    %p10 = scmp.lt.s32.totalorder %s9, 0
    %s11 = scalar_select %p10, %s9, 0
    %s12 = smul.addr %s11, 8
    %s13 = scalar_lea.vmem %s0, %s12
    %s14 = sadd.s32 0, 0
  $region5: #{psnr_loss.1} parent=0 // pred_fallthru
    _
  // Predicated region
  $region6: #{psnr_loss.1} parent=0 // pred_check
    _
  $region7: #{psnr_loss.1} parent=0 // pred_check_branch
    %16 = sbr.rel (0) target = $region9
  $region8: #{psnr_loss.1} parent=0 // pred_region
    %s17 = sadd.s32 0, 0
    %p18 = scmp.lt.s32.totalorder %s17, 0
    %s19 = scalar_select %p18, %s17, 0
    %s20 = smul.addr %s19, 8
    %s21 = scalar_lea.vmem %s1, %s20
    %s22 = sadd.s32 0, 0
  $region9: #{psnr_loss.1} parent=0 // pred_fallthru
    _
  %s23 = sadd.s32 0, 0
  %p24 = scmp.lt.s32.totalorder %s23, 0
  %s25 = scalar_select %p24, %s23, 0
  %s26 = smul.addr %s25, 8
  %s27 = scalar_lea.vmem %s0, %s26
  %s28 = sadd.s32 0, 0
  %p29 = scmp.lt.s32.totalorder %s28, 0
  %s30 = scalar_select %p29, %s28, 0
  %s31 = smul.addr %s30, 8
  %s32 = scalar_lea.vmem %s1, %s31
  %s33 = sadd.s32 0, 0
  %p34 = scmp.lt.s32.totalorder %s33, 0
  %s35 = scalar_select %p34, %s33, 0
  %s36 = smul.addr %s35, 8
  %s37 = scalar_lea.vmem %s0, %s36
  %s38 = sadd.s32 0, 0
  %s39 = sadd.s32 0, 0
  %p40 = scmp.lt.s32.totalorder %s39, 0
  %s41 = scalar_select %p40, %s39, 0
  %s42 = smul.addr %s41, 8
  %s43 = scalar_lea.vmem %s1, %s42
  %s44 = sadd.s32 0, 0
  %p45 = scmp.eq.s32.totalorder 0, 0
  // Predicated region
  $region10: #{psnr_loss.1} parent=0 // pred_check
    %p46 = pneg %p45
  $region11: #{psnr_loss.1} parent=0 // pred_check_branch
    %48 = sbr.rel (%p46) target = $region13
  $region12: #{psnr_loss.1} parent=0 // pred_region
    %49 = vst [vmem:[%s2] sm:$0xff] 0.0
    %50 = vst [vmem:[%s2 + $0x8] sm:$0xff] 0.0
  $region13: #{psnr_loss.1} parent=0 // pred_fallthru
    _
  %v51 = vld [vmem:[%s37] sm:$0xff]
  %v52 = vld [vmem:[%s37 + $0x8] sm:$0xff]
  %v53 = vld [vmem:[%s43] sm:$0xff]
  %v54 = vld [vmem:[%s43 + $0x8] sm:$0xff]
  %v55 = vsub.f32 %v51, %v53
  %v56 = vsub.f32 %v52, %v54
  %v57 = vld [vmem:[%s2] sm:$0xff]
  %v58 = vld [vmem:[%s2 + $0x8] sm:$0xff]
  %v59 = vmul.f32 %v55, %v55
  %v60 = vmul.f32 %v56, %v56
  %v61 = vadd.f32 %v57, %v59
  %v62 = vadd.f32 %v58, %v60
  %63 = vst [vmem:[%s2] sm:$0xff] %v61
  %64 = vst [vmem:[%s2 + $0x8] sm:$0xff] %v62
  // Predicated region
  $region14: #{psnr_loss.1} parent=0 // pred_check
    _
  $region15: #{psnr_loss.1} parent=0 // pred_check_branch
    %66 = sbr.rel (0) target = $region17
  $region16: #{psnr_loss.1} parent=0 // pred_region
    _
  $region17: #{psnr_loss.1} parent=0 // pred_fallthru
    _
  // Predicated region
  $region18: #{psnr_loss.1} parent=0 // pred_check
    _
  $region19: #{psnr_loss.1} parent=0 // pred_check_branch
    %68 = sbr.rel (0) target = $region21
  $region20: #{psnr_loss.1} parent=0 // pred_region
    _
  $region21: #{psnr_loss.1} parent=0 // pred_fallthru
    _

</llo_original>
